<compile_context>
chip_gen: v7x
topology: tpu7x:2x2x1
jax: 0.10.0
libtpu: 0.0.40
codegen_flags: <defaults>
</compile_context>

<pallas_src>
import functools

import jax
import jax.numpy as jnp
from jax import lax
from jax.experimental import pallas as pl
from jax.experimental.pallas import tpu as pltpu


def _adain1d_kernel(x_ref, p_ref, o_ref, *, inv_l, eps):
    # x_ref/o_ref: (TR, L)   p_ref: (TR, 2) packed as [scale+1, shift]
    xf = x_ref[...].astype(jnp.float32)

    # Two-pass (shifted) per-row stats over L, f32 accumulation.
    mean = jnp.sum(xf, axis=-1, keepdims=True) * inv_l        # (TR, 1)
    c = xf - mean                                             # centered tile
    var = jnp.sum(c * c, axis=-1, keepdims=True) * inv_l      # (TR, 1), >= 0
    inv_std = lax.rsqrt(var + eps)

    # Fold InstanceNorm + adaptive affine: out = (x-mean)*((scale+1)/std)+shift
    a = p_ref[:, 0:1].astype(jnp.float32) * inv_std           # (TR, 1)
    shift = p_ref[:, 1:2].astype(jnp.float32)                 # (TR, 1)
    o_ref[...] = (c * a + shift).astype(o_ref.dtype)


def _round_up(n, m):
    return ((n + m - 1) // m) * m


def _vmem_capacity_bytes():
    # Per-generation VMEM: 128 MiB on v5e/v6e, 64 MiB per TC on v7x.
    try:
        info = pltpu.get_tpu_info()
        cap = getattr(info, "vmem_capacity_bytes", None)
        if cap:
            return int(cap)
    except Exception:
        pass
    return 64 << 20  # conservative fallback (v7x per-TensorCore VMEM)


def adain1d_upd(x, z, w, b, *, eps=1e-5):
    """x: (B, C, L); z: (B, Z); w: (2C, Z) [PyTorch Linear layout]; b: (2C,)."""
    B, C, L = x.shape
    dt = x.dtype
    itemsize = jnp.dtype(dt).itemsize
    R = B * C

    # Adaptive affine params: one small batched GEMM in XLA, not in-kernel.
    vb = z.astype(jnp.float32) @ w.astype(jnp.float32).T + b.astype(jnp.float32)
    vb = vb.reshape(B, 2, C)
    # Pack (scale+1, shift) -> (R, 2): one DMA per grid step.
    params = jnp.stack([vb[:, 0] + 1.0, vb[:, 1]], axis=-1).reshape(R, 2)

    # Flatten (B, C) -> rows. No padding and no output slice: L is a
    # full-extent block dim; the partial last row-tile is edge-masked.
    x2 = x.reshape(R, L)

    # Per-generation VMEM sizing with f32-temp accounting.
    vmem_cap = _vmem_capacity_bytes()
    # ~52 MiB on a 64 MiB (v7x) part, ~100 MiB on 128 MiB (v5e/v6e) parts.
    vmem_limit = int(max(32 << 20, min(vmem_cap - (12 << 20), 100 << 20)))
    budget = (vmem_limit * 3) // 4
    # Per-row footprint: double-buffered in+out blocks, packed params, and
    # ~2 f32 temporaries (upcast tile + centered tile) for the compute.
    bytes_per_row = 4 * L * itemsize + 2 * L * 4 + 4 * 2 * 4
    tr = (budget // bytes_per_row) // 8 * 8
    TR = int(max(8, min(tr, 2048, _round_up(R, 8))))
    grid_r = pl.cdiv(R, TR)

    kernel = functools.partial(_adain1d_kernel, inv_l=1.0 / L, eps=float(eps))

    cost = pl.CostEstimate(
        flops=int(8 * R * L),
        transcendentals=int(R),
        bytes_accessed=int(2 * R * L * itemsize + 2 * R * 2 * 4),
    )

    out = pl.pallas_call(
        kernel,
        out_shape=jax.ShapeDtypeStruct((R, L), dt),
        grid_spec=pltpu.PrefetchScalarGridSpec(
            num_scalar_prefetch=0,
            grid=(grid_r,),
            in_specs=[
                pl.BlockSpec((TR, L), lambda i: (i, 0)),   # x rows
                pl.BlockSpec((TR, 2), lambda i: (i, 0)),   # packed scale/shift
            ],
            out_specs=pl.BlockSpec((TR, L), lambda i: (i, 0)),
        ),
        compiler_params=pltpu.CompilerParams(
            dimension_semantics=("parallel",),
            vmem_limit_bytes=vmem_limit,
        ),
        cost_estimate=cost,
    )(x2, params)

    return out.reshape(B, C, L)


def adain1d_ref(x, z, w, b):
    # Pure-JAX reference matching the PyTorch forward exactly.
    mean = jnp.mean(x, axis=-1, keepdims=True)
    var = jnp.mean((x - mean) ** 2, axis=-1, keepdims=True)
    xn = (x - mean) / jnp.sqrt(var + 1e-5)
    vb = z @ w.T + b                                   # (B, 2C)
    B, C = x.shape[0], x.shape[1]
    vb = vb.reshape(B, 2, C)
    return xn * (vb[:, 0][:, :, None] + 1.0) + vb[:, 1][:, :, None]


if __name__ == "__main__":
    # Small shapes: batch=2, num_features(C)=4, length(L)=16, num_latent=8
    B, C, L, Z = 2, 4, 16, 8

    key = jax.random.PRNGKey(0)
    kx, kz, kw, kb = jax.random.split(key, 4)

    x = jax.random.normal(kx, (B, C, L), dtype=jnp.float32)
    z = jax.random.normal(kz, (B, Z), dtype=jnp.float32)

    # nn.Linear(num_latent, 2*num_features): weight (2C, Z), bias (2C,)
    bound = 1.0 / (Z ** 0.5)
    w = jax.random.uniform(kw, (2 * C, Z), minval=-bound, maxval=bound,
                           dtype=jnp.float32)
    b = jax.random.uniform(kb, (2 * C,), minval=-bound, maxval=bound,
                           dtype=jnp.float32)

    fn = jax.jit(adain1d_upd)
    out = jax.block_until_ready(fn(x, z, w, b))

    ref = adain1d_ref(x, z, w, b)
    assert out.shape == (B, C, L)
    assert jnp.allclose(out, ref, atol=1e-4, rtol=1e-4), "mismatch vs reference"

    print("KERNEL_OK")
</pallas_src>

<mosaic_0001>
module attributes {stable_mosaic.version = 11 : i64} {
  func.func @_adain1d_kernel(%arg0: i32, %arg1: memref<8x16xf32, #tpu.memory_space<vmem>>, %arg2: memref<8x2xf32, #tpu.memory_space<vmem>>, %arg3: memref<8x16xf32, #tpu.memory_space<vmem>>) attributes {dimension_semantics = [#tpu.dimension_semantics<parallel>], iteration_bounds = array<i64: 1>, scalar_prefetch = 0 : i64, scratch_operands = 0 : i64, tpu.core_type = #tpu.core_type<tc>, window_params = [{transform_indices = @transform_0, window_bounds = array<i64: 8, 16>}, {transform_indices = @transform_1, window_bounds = array<i64: 8, 2>}, {transform_indices = @transform_2, window_bounds = array<i64: 8, 16>}]} {
    %c0 = arith.constant 0 : index
    %c0_0 = arith.constant 0 : index
    %0 = vector.load %arg1[%c0, %c0_0] : memref<8x16xf32, #tpu.memory_space<vmem>>, vector<8x16xf32>
    %cst = arith.constant dense<0.000000e+00> : vector<8xf32>
    %1 = vector.multi_reduction <add>, %0, %cst [1] : vector<8x16xf32> to vector<8xf32>
    %2 = vector.shape_cast %1 : vector<8xf32> to vector<8x1xf32>
    %cst_1 = arith.constant 6.250000e-02 : f32
    %3 = vector.broadcast %cst_1 : f32 to vector<8x1xf32>
    %4 = arith.mulf %2, %3 : vector<8x1xf32>
    %5 = vector.broadcast %4 : vector<8x1xf32> to vector<8x16xf32>
    %6 = arith.subf %0, %5 : vector<8x16xf32>
    %7 = arith.mulf %6, %6 : vector<8x16xf32>
    %cst_2 = arith.constant dense<0.000000e+00> : vector<8xf32>
    %8 = vector.multi_reduction <add>, %7, %cst_2 [1] : vector<8x16xf32> to vector<8xf32>
    %9 = vector.shape_cast %8 : vector<8xf32> to vector<8x1xf32>
    %cst_3 = arith.constant 6.250000e-02 : f32
    %10 = vector.broadcast %cst_3 : f32 to vector<8x1xf32>
    %11 = arith.mulf %9, %10 : vector<8x1xf32>
    %cst_4 = arith.constant 9.99999974E-6 : f32
    %12 = vector.broadcast %cst_4 : f32 to vector<8x1xf32>
    %13 = arith.addf %11, %12 : vector<8x1xf32>
    %14 = math.rsqrt %13 : vector<8x1xf32>
    %c0_5 = arith.constant 0 : index
    %c0_6 = arith.constant 0 : index
    %15 = vector.load %arg2[%c0_5, %c0_6] : memref<8x2xf32, #tpu.memory_space<vmem>>, vector<8x1xf32>
    %16 = arith.mulf %15, %14 : vector<8x1xf32>
    %c0_7 = arith.constant 0 : index
    %c1 = arith.constant 1 : index
    %17 = vector.load %arg2[%c0_7, %c1] : memref<8x2xf32, #tpu.memory_space<vmem>>, vector<8x1xf32>
    %18 = vector.broadcast %16 : vector<8x1xf32> to vector<8x16xf32>
    %19 = arith.mulf %6, %18 : vector<8x16xf32>
    %20 = vector.broadcast %17 : vector<8x1xf32> to vector<8x16xf32>
    %21 = arith.addf %19, %20 : vector<8x16xf32>
    %c0_8 = arith.constant 0 : index
    %c0_9 = arith.constant 0 : index
    %22 = vector.load %arg3[%c0_8, %c0_9] : memref<8x16xf32, #tpu.memory_space<vmem>>, vector<8x16xf32>
    tpu.vector_store %arg3[%c0_8, %c0_9], %21 {strides = array<i32>} : memref<8x16xf32, #tpu.memory_space<vmem>>, vector<8x16xf32>,
    return
  }
  func.func @transform_0(%arg0: i32) -> (i32, i32) {
    %c0_i32 = arith.constant 0 : i32
    %c0_i32_0 = arith.constant 0 : i32
    return %arg0, %c0_i32 : i32, i32
  }
  func.func @transform_1(%arg0: i32) -> (i32, i32) {
    %c0_i32 = arith.constant 0 : i32
    %c0_i32_0 = arith.constant 0 : i32
    return %arg0, %c0_i32 : i32, i32
  }
  func.func @transform_2(%arg0: i32) -> (i32, i32) {
    %c0_i32 = arith.constant 0 : i32
    %c0_i32_0 = arith.constant 0 : i32
    return %arg0, %c0_i32 : i32, i32
  }
}

</mosaic_0001>

<llo_original>
// kernel: adain1d_upd.1
$region0: #{adain1d_upd.1}
  #allocation0 [shape = 'u32[]', space=smem, size = 0x4, offset = 0x4, fixed_abs, tag = 'smem constant byte address 0x4 - core index']
  #allocation1 [shape = 'u32[144,128]{1,0:T(1,128)}', space=vmem, size = 0x12000, scoped, tag = 'internal scratch']
  %s0 = inlined_call_operand.vmem [shape: f32[8,16], index: 0, kind: input, shape index: {}]
  %s1 = inlined_call_operand.vmem [shape: f32[8,2], index: 1, kind: input, shape index: {}]
  %s2 = inlined_call_operand.hbm [shape: f32[8,16], index: 2, kind: output, shape index: {}]
  %s3 = sld [smem:[#allocation0]]
  $region18: #{adain1d_upd.1} parent=0
    _
  %s5 = ssub.s32 1, %s3
  %s6 = scalar_select 0, %s5, %s3
  $region1: #{adain1d_upd.1} parent=0
    #allocation2 [shape = 'u8[4096]{0}', space=vmem, size = 0x1000, scoped, tag = 'output window, operand 0, single buffered']
    #allocation3 [shape = 's32[1]{0}', space=sflag, size = 0x4, scoped, tag = 'scoped memory for adain1d_upd.1']
    %7 = vsyncpa [#allocation3], 0
    // Predicated region
    $region2: #{adain1d_upd.1} parent=1 // pred_check
      _
    $region3: #{adain1d_upd.1} parent=1 // pred_check_branch
      %9 = sbr.rel (0) target = $region5
    $region4: #{adain1d_upd.1} parent=1 // pred_region
      _
    $region5: #{adain1d_upd.1} parent=1 // pred_fallthru
      _
    // Predicated region
    $region6: #{adain1d_upd.1} parent=1 // pred_check
      _
    $region7: #{adain1d_upd.1} parent=1 // pred_check_branch
      %11 = sbr.rel (0) target = $region9
    $region8: #{adain1d_upd.1} parent=1 // pred_region
      _
    $region9: #{adain1d_upd.1} parent=1 // pred_fallthru
      _
    %v12 = vld [vmem:[%s0] sm:$0xff]
    %vm13 = vcmask 130048
    %v14 = vsel %vm13, %v12, 0.0
    %15 = vadd.xlane.f32.xlu0 %v14
    %v16 = vpop.xlane.xlu0 %15
    %v17 = vmul.f32 %v16, 0.0625
    %v18 = vsub.f32 %v12, %v17
    %v19 = vmul.f32 %v18, %v18
    %v20 = vsel %vm13, %v19, 0.0
    %21 = vadd.xlane.f32.xlu0 %v20
    %v22 = vpop.xlane.xlu0 %21
    %v23 = vmul.f32 %v22, 0.0625
    %v24 = vadd.f32 %v23, 1e-05
    %v25 = vrsqrt.pop %v24
    %v26 = vld [vmem:[%s1] sm:$0xff]
    %v27 = vmul.f32 %v26, %v25
    %29 = vset.pattern.permute.xlu0 0
    %30 = vperm.xlu0 %29, %v27
    %v31 = vpop.permute.xlu0 %30
    %v33 = vmul.f32 %v18, %v31
    %35 = vset.pattern.permute.xlu0 1
    %36 = vperm.xlu0 %35, %v26
    %v37 = vpop.permute.xlu0 %36
    %v39 = vadd.f32 %v33, %v37
    %40 = vst.msk [vmem:[#allocation2] sm:$0xff] %vm13, %v39
    // Predicated region
    $region10: #{adain1d_upd.1} parent=1 // pred_check
      _
    $region11: #{adain1d_upd.1} parent=1 // pred_check_branch
      %42 = sbr.rel (0) target = $region13
    $region12: #{adain1d_upd.1} parent=1 // pred_region
      %s44 = ssub.s32 128, 128
      %45 = vsyncadd [#allocation3], %s44
      %s47 = sshll.u32 [#allocation2], 4
      %s48 = int_to_ptr.vmem [resolvable:$true] %s47
      %50 = dma.vmem_to_hbm [thread:$0]  %s48, 128, %s2, [#allocation3]
    $region13: #{adain1d_upd.1} parent=1 // pred_fallthru
      _
    // Predicated region
    $region14: #{adain1d_upd.1} parent=1 // pred_check
      _
    $region15: #{adain1d_upd.1} parent=1 // pred_check_branch
      %52 = sbr.rel (0) target = $region17
    $region16: #{adain1d_upd.1} parent=1 // pred_region
      %53 = dma.done [#allocation3], 128
    $region17: #{adain1d_upd.1} parent=1 // pred_fallthru
      _
    %54 = vsyncpa [#allocation3], 1

</llo_original>
